<compile_context>
chip_gen: v6e
topology: v6e:2x2x1
jax: 0.10.0
libtpu: 0.0.40
codegen_flags: <defaults>
</compile_context>

<pallas_src>
import functools
import math

import jax
import jax.numpy as jnp
from jax.experimental import pallas as pl
from jax.experimental.pallas import tpu as pltpu


def _round_up(x, m):
    return ((x + m - 1) // m) * m


def _cdiv(a, b):
    return -(-a // b)


def _gelu_exact(x):
    # matches torch.nn.GELU(approximate='none'); computed in f32
    return 0.5 * x * (1.0 + jax.lax.erf(x * 0.7071067811865476))


def _gelu_tanh(x):
    # tanh goes to the EUP (separate bundle slot); differs from exact erf by
    # ~1e-3, below the bf16 rounding already present on this path.
    return jax.nn.gelu(x, approximate=True)


def _maybe_pad2d(a, rows, cols):
    r, c = a.shape
    if r == rows and c == cols:
        return a
    return jnp.pad(a, ((0, rows - r), (0, cols - c)))


def _vmem_budget_bytes():
    cap = None
    try:
        info = pltpu.get_tpu_info()
        cap = getattr(info, "vmem_capacity_bytes", None)
    except Exception:
        cap = None
    if not cap:
        cap = 64 * 1024 * 1024   # conservative default: v7x has 64 MiB per TC
    return int(cap) * 3 // 4     # leave headroom for Mosaic internal scratch


# ----------------------------- kernels --------------------------------------

def _ffn_kernel_resident(x_ref, w1_ref, b1_ref, w2_ref, b2_ref, o_ref, *, gelu_fn):
    """Weights-resident path: full hidden dim per step, no accumulator scratch."""
    x = x_ref[...].astype(w1_ref.dtype)          # in-kernel cast, hidden under MXU
    pre = jnp.dot(x, w1_ref[...], preferred_element_type=jnp.float32)
    pre = pre + b1_ref[...]                      # b1 is already f32
    act = gelu_fn(pre)
    # TODO(synk): dropout with p>0 in training mode would need pltpu.prng_* masking here.
    y = jnp.dot(act.astype(w2_ref.dtype), w2_ref[...],
                preferred_element_type=jnp.float32)
    o_ref[...] = (y + b2_ref[...]).astype(o_ref.dtype)


def _ffn_kernel_reduce(x_ref, w1_ref, b1_ref, w2_ref, b2_ref, o_ref, acc_ref, *,
                       gelu_fn):
    """Fallback path: hidden dim is the (last, 'arbitrary') reduction grid axis."""
    h_idx = pl.program_id(1)

    @pl.when(h_idx == 0)
    def _init():
        acc_ref[...] = jnp.zeros_like(acc_ref)

    x = x_ref[...].astype(w1_ref.dtype)
    pre = jnp.dot(x, w1_ref[...], preferred_element_type=jnp.float32) + b1_ref[...]
    act = gelu_fn(pre)
    acc_ref[...] += jnp.dot(act.astype(w2_ref.dtype), w2_ref[...],
                            preferred_element_type=jnp.float32)

    @pl.when(h_idx == pl.num_programs(1) - 1)
    def _finalize():
        o_ref[...] = (acc_ref[...] + b2_ref[...]).astype(o_ref.dtype)


# ----------------------------- wrapper ---------------------------------------

def feed_forward(x, w1, b1, w2, b2, *, tile_rows=512, tile_hidden=512,
                 compute_dtype=jnp.bfloat16, gelu_approximate=False,
                 _force_reduce=False):
    """x: (B, S, D); w1: (D, H); b1: (H,); w2: (H, D); b2: (D,).

    NOTE: for production, hoist the weight cast/pad (w1p/w2p/b1p/b2p below) out
    of the per-call hot path; x itself is never copied here unless padding is
    actually required (the bf16 cast happens inside the kernel).
    """
    B, S, D = x.shape
    H = w1.shape[1]
    assert w1.shape == (D, H) and b1.shape == (H,)
    assert w2.shape == (H, D) and b2.shape == (D,)

    n_rows = B * S
    out_dtype = x.dtype
    gelu_fn = _gelu_tanh if gelu_approximate else _gelu_exact

    d_pad = _round_up(D, 128)
    h_pad = _round_up(H, 128)

    cbytes = jnp.dtype(compute_dtype).itemsize
    xbytes = jnp.dtype(x.dtype).itemsize
    obytes = jnp.dtype(out_dtype).itemsize
    budget = _vmem_budget_bytes()

    # --- row tile: balanced across tiles, multiple of 16 (bf16 sublanes) -----
    if n_rows <= tile_rows:
        tile_r = _round_up(max(n_rows, 1), 16)
    else:
        n_tiles = _cdiv(n_rows, tile_rows)
        tile_r = _round_up(_cdiv(n_rows, n_tiles), 16)

    # --- choose weights-resident plan vs hidden-reduction fallback -----------
    def resident_vmem(tr, weight_bufs):
        return (2 * d_pad * h_pad * cbytes * weight_bufs        # W1 + W2
                + 2 * (h_pad + d_pad) * 4                       # biases (f32), 2-buf
                + 2 * tr * d_pad * (xbytes + obytes)            # x / out tiles, 2-buf
                + tr * h_pad * (4 + cbytes))                    # GELU intermediate

    resident = False
    resident_bufs = 2
    if not _force_reduce:
        cand, t = [], tile_r
        while True:
            cand.append(t)
            if t <= 16:
                break
            t = max(16, _round_up(t // 2, 16))
        for t in cand:
            if resident_vmem(t, 2) <= budget:
                resident, tile_r, resident_bufs = True, t, 2
                break
            if resident_vmem(t, 1) <= budget:
                resident, tile_r, resident_bufs = True, t, 1
                break

    if resident:
        rows_pad = _round_up(n_rows, tile_r)
        grid = (rows_pad // tile_r,)
        # Constant-index weight blocks: DMAed once, stay resident.  Only
        # single-buffer them when that is what makes the plan fit (large models
        # on v7x); otherwise keep the default buffering.
        w_pipe = {} if resident_bufs == 2 else dict(pipeline_mode=pl.Buffered(1))
        in_specs = [
            pl.BlockSpec((tile_r, d_pad), lambda i: (i, 0)),            # x row tile
            pl.BlockSpec((d_pad, h_pad), lambda i: (0, 0), **w_pipe),   # W1 resident
            pl.BlockSpec((1, h_pad), lambda i: (0, 0)),                 # b1
            pl.BlockSpec((h_pad, d_pad), lambda i: (0, 0), **w_pipe),   # W2 resident
            pl.BlockSpec((1, d_pad), lambda i: (0, 0)),                 # b2
        ]
        out_spec = pl.BlockSpec((tile_r, d_pad), lambda i: (i, 0))
        scratch = []
        kernel = functools.partial(_ffn_kernel_resident, gelu_fn=gelu_fn)
        dim_sem = ("parallel",)
        bytes_accessed = (rows_pad * d_pad * xbytes
                          + 2 * d_pad * h_pad * cbytes           # weights read once
                          + (h_pad + d_pad) * 4
                          + rows_pad * d_pad * obytes)
    else:
        tile_h = min(_round_up(tile_hidden, 128), h_pad)

        def reduce_vmem(tr, th):
            return (2 * tr * d_pad * (xbytes + obytes)           # x / out tiles
                    + 2 * 2 * d_pad * th * cbytes                # W1/W2 slices, 2-buf
                    + tr * d_pad * 4                             # f32 accumulator
                    + tr * th * (4 + cbytes)                     # GELU intermediate
                    + 2 * (th + d_pad) * 4)                      # biases

        while reduce_vmem(tile_r, tile_h) > budget and tile_r > 16:
            tile_r = max(16, _round_up(tile_r // 2, 16))
        while reduce_vmem(tile_r, tile_h) > budget and tile_h > 128:
            tile_h = max(128, _round_up(tile_h // 2, 128))

        h_pad = _round_up(H, tile_h)
        rows_pad = _round_up(n_rows, tile_r)
        grid = (rows_pad // tile_r, h_pad // tile_h)
        in_specs = [
            pl.BlockSpec((tile_r, d_pad), lambda i, h: (i, 0)),   # x row tile
            pl.BlockSpec((d_pad, tile_h), lambda i, h: (0, h)),   # W1 hidden slice
            pl.BlockSpec((1, tile_h), lambda i, h: (0, h)),       # b1 hidden slice
            pl.BlockSpec((tile_h, d_pad), lambda i, h: (h, 0)),   # W2 hidden slice
            pl.BlockSpec((1, d_pad), lambda i, h: (0, 0)),        # b2
        ]
        out_spec = pl.BlockSpec((tile_r, d_pad), lambda i, h: (i, 0))
        scratch = [pltpu.VMEM((tile_r, d_pad), jnp.float32)]
        kernel = functools.partial(_ffn_kernel_reduce, gelu_fn=gelu_fn)
        dim_sem = ("parallel", "arbitrary")
        bytes_accessed = (rows_pad * d_pad * xbytes
                          + grid[0] * 2 * d_pad * h_pad * cbytes  # W1/W2 per row tile
                          + (h_pad + d_pad) * 4
                          + rows_pad * d_pad * obytes)

    # --- pad only when needed; weights cast to bf16 (hoist out in production) --
    x2d = _maybe_pad2d(x.reshape(n_rows, D), rows_pad, d_pad)
    w1p = _maybe_pad2d(w1.astype(compute_dtype), d_pad, h_pad)
    w2p = _maybe_pad2d(w2.astype(compute_dtype), h_pad, d_pad)
    b1p = _maybe_pad2d(b1.astype(jnp.float32).reshape(1, H), 1, h_pad)
    b2p = _maybe_pad2d(b2.astype(jnp.float32).reshape(1, D), 1, d_pad)

    cost = pl.CostEstimate(
        flops=4 * rows_pad * d_pad * h_pad,          # two matmuls
        transcendentals=rows_pad * h_pad,            # erf/tanh per hidden element
        bytes_accessed=int(bytes_accessed),
    )

    out2d = pl.pallas_call(
        kernel,
        out_shape=jax.ShapeDtypeStruct((rows_pad, d_pad), out_dtype),
        grid_spec=pltpu.PrefetchScalarGridSpec(
            num_scalar_prefetch=0,
            grid=grid,
            in_specs=in_specs,
            out_specs=out_spec,
            scratch_shapes=scratch,
        ),
        compiler_params=pltpu.CompilerParams(
            dimension_semantics=dim_sem,
            vmem_limit_bytes=int(budget),
        ),
        cost_estimate=cost,
    )(x2d, w1p, b1p, w2p, b2p)

    return out2d[:n_rows, :D].reshape(B, S, D)


def init_params(key, dim, hidden_dim, dtype=jnp.float32):
    # PyTorch nn.Linear default init: U(-1/sqrt(fan_in), 1/sqrt(fan_in))
    k1, k2, k3, k4 = jax.random.split(key, 4)
    lim1 = 1.0 / math.sqrt(dim)
    lim2 = 1.0 / math.sqrt(hidden_dim)
    w1 = jax.random.uniform(k1, (dim, hidden_dim), dtype, -lim1, lim1)
    b1 = jax.random.uniform(k2, (hidden_dim,), dtype, -lim1, lim1)
    w2 = jax.random.uniform(k3, (hidden_dim, dim), dtype, -lim2, lim2)
    b2 = jax.random.uniform(k4, (dim,), dtype, -lim2, lim2)
    return w1, b1, w2, b2


def _ref_bf16(x, w1, b1, w2, b2):
    """Reference emulating the kernel's bf16-operand / f32-accumulate matmuls."""
    B, S, D = x.shape
    cd = jnp.bfloat16
    x2 = x.reshape(-1, D).astype(cd)
    h = jnp.dot(x2, w1.astype(cd), preferred_element_type=jnp.float32) + b1
    h = 0.5 * h * (1.0 + jax.lax.erf(h * 0.7071067811865476))
    y = jnp.dot(h.astype(cd), w2.astype(cd), preferred_element_type=jnp.float32) + b2
    return y.reshape(B, S, D).astype(x.dtype)


if __name__ == "__main__":
    key = jax.random.PRNGKey(0)
    B, S, D, H = 2, 8, 32, 64   # batch, seq, dim, hidden_dim

    kx, kp, kp2 = jax.random.split(key, 3)
    x = jax.random.normal(kx, (B, S, D), jnp.float32)
    w1, b1, w2, b2 = init_params(kp, D, H)

    # --- weights-resident fast path -----------------------------------------
    y = feed_forward(x, w1, b1, w2, b2)
    y = jax.block_until_ready(y)
    assert y.shape == (B, S, D)
    assert y.dtype == x.dtype

    y_ref = _ref_bf16(x, w1, b1, w2, b2)
    assert jnp.allclose(y, y_ref, atol=2e-2, rtol=2e-2), "mismatch vs bf16 reference"

    # Loose sanity check against exact f32 torch semantics (bf16 rounding only).
    h32 = x @ w1 + b1
    h32 = 0.5 * h32 * (1.0 + jax.lax.erf(h32 / jnp.sqrt(2.0)))
    y32 = h32 @ w2 + b2
    assert jnp.allclose(y, y32, atol=1e-1, rtol=1e-1), "mismatch vs f32 reference"

    # --- hidden-reduction fallback path (multi-step accumulation) -----------
    H2 = 256
    w1b, b1b, w2b, b2b = init_params(kp2, D, H2)
    y2 = feed_forward(x, w1b, b1b, w2b, b2b, _force_reduce=True, tile_hidden=128)
    y2 = jax.block_until_ready(y2)
    y2_ref = _ref_bf16(x, w1b, b1b, w2b, b2b)
    assert jnp.allclose(y2, y2_ref, atol=2e-2, rtol=2e-2), "mismatch (reduce path)"

    print("KERNEL_OK")
</pallas_src>

<mosaic_0001>
module attributes {stable_mosaic.version = 11 : i64} {
  func.func @_ffn_kernel_resident(%arg0: i32, %arg1: memref<16x128xf32, #tpu.memory_space<vmem>>, %arg2: memref<128x128xbf16, #tpu.memory_space<vmem>>, %arg3: memref<1x128xf32, #tpu.memory_space<vmem>>, %arg4: memref<128x128xbf16, #tpu.memory_space<vmem>>, %arg5: memref<1x128xf32, #tpu.memory_space<vmem>>, %arg6: memref<16x128xf32, #tpu.memory_space<vmem>>) attributes {dimension_semantics = [#tpu.dimension_semantics<parallel>], iteration_bounds = array<i64: 1>, scalar_prefetch = 0 : i64, scratch_operands = 0 : i64, tpu.core_type = #tpu.core_type<tc>, window_params = [{transform_indices = @transform_0, window_bounds = array<i64: 16, 128>}, {pipeline_mode = #tpu.pipeline_mode<synchronous>, transform_indices = @transform_1, window_bounds = array<i64: 128, 128>}, {pipeline_mode = #tpu.pipeline_mode<synchronous>, transform_indices = @transform_2, window_bounds = array<i64: 1, 128>}, {pipeline_mode = #tpu.pipeline_mode<synchronous>, transform_indices = @transform_3, window_bounds = array<i64: 128, 128>}, {pipeline_mode = #tpu.pipeline_mode<synchronous>, transform_indices = @transform_4, window_bounds = array<i64: 1, 128>}, {transform_indices = @transform_5, window_bounds = array<i64: 16, 128>}]} {
    %c0 = arith.constant 0 : index
    %c0_0 = arith.constant 0 : index
    %0 = vector.load %arg1[%c0, %c0_0] : memref<16x128xf32, #tpu.memory_space<vmem>>, vector<16x128xf32>
    %1 = arith.truncf %0 : vector<16x128xf32> to vector<16x128xbf16>
    %c0_1 = arith.constant 0 : index
    %c0_2 = arith.constant 0 : index
    %2 = vector.load %arg2[%c0_1, %c0_2] : memref<128x128xbf16, #tpu.memory_space<vmem>>, vector<128x128xbf16>
    %cst = arith.constant dense<0.000000e+00> : vector<16x128xf32>
    %3 = tpu.matmul %1, %2, %cst {dimension_numbers = #tpu.dot_dimension_numbers<[1], [0], [0], [1], [0, 0, 1, 1], [], []>} : vector<16x128xbf16>, vector<128x128xbf16>, vector<16x128xf32> -> vector<16x128xf32>
    %c0_3 = arith.constant 0 : index
    %c0_4 = arith.constant 0 : index
    %4 = vector.load %arg3[%c0_3, %c0_4] : memref<1x128xf32, #tpu.memory_space<vmem>>, vector<1x128xf32>
    %5 = vector.broadcast %4 : vector<1x128xf32> to vector<16x128xf32>
    %6 = arith.addf %3, %5 : vector<16x128xf32>
    %cst_5 = arith.constant 5.000000e-01 : f32
    %7 = vector.broadcast %cst_5 : f32 to vector<16x128xf32>
    %8 = arith.mulf %7, %6 : vector<16x128xf32>
    %cst_6 = arith.constant 0.707106769 : f32
    %9 = vector.broadcast %cst_6 : f32 to vector<16x128xf32>
    %10 = arith.mulf %6, %9 : vector<16x128xf32>
    %11 = math.erf %10 : vector<16x128xf32>
    %cst_7 = arith.constant 1.000000e+00 : f32
    %12 = vector.broadcast %cst_7 : f32 to vector<16x128xf32>
    %13 = arith.addf %12, %11 : vector<16x128xf32>
    %14 = arith.mulf %8, %13 : vector<16x128xf32>
    %15 = arith.truncf %14 : vector<16x128xf32> to vector<16x128xbf16>
    %c0_8 = arith.constant 0 : index
    %c0_9 = arith.constant 0 : index
    %16 = vector.load %arg4[%c0_8, %c0_9] : memref<128x128xbf16, #tpu.memory_space<vmem>>, vector<128x128xbf16>
    %cst_10 = arith.constant dense<0.000000e+00> : vector<16x128xf32>
    %17 = tpu.matmul %15, %16, %cst_10 {dimension_numbers = #tpu.dot_dimension_numbers<[1], [0], [0], [1], [0, 0, 1, 1], [], []>} : vector<16x128xbf16>, vector<128x128xbf16>, vector<16x128xf32> -> vector<16x128xf32>
    %c0_11 = arith.constant 0 : index
    %c0_12 = arith.constant 0 : index
    %18 = vector.load %arg5[%c0_11, %c0_12] : memref<1x128xf32, #tpu.memory_space<vmem>>, vector<1x128xf32>
    %19 = vector.broadcast %18 : vector<1x128xf32> to vector<16x128xf32>
    %20 = arith.addf %17, %19 : vector<16x128xf32>
    %c0_13 = arith.constant 0 : index
    %c0_14 = arith.constant 0 : index
    %21 = vector.load %arg6[%c0_13, %c0_14] : memref<16x128xf32, #tpu.memory_space<vmem>>, vector<16x128xf32>
    tpu.vector_store %arg6[%c0_13, %c0_14], %20 {strides = array<i32>} : memref<16x128xf32, #tpu.memory_space<vmem>>, vector<16x128xf32>,
    return
  }
  func.func @transform_0(%arg0: i32) -> (i32, i32) {
    %c0_i32 = arith.constant 0 : i32
    %c0_i32_0 = arith.constant 0 : i32
    return %arg0, %c0_i32 : i32, i32
  }
  func.func @transform_1(%arg0: i32) -> (i32, i32) {
    %c0_i32 = arith.constant 0 : i32
    %c0_i32_0 = arith.constant 0 : i32
    %c0_i32_1 = arith.constant 0 : i32
    return %c0_i32, %c0_i32_0 : i32, i32
  }
  func.func @transform_2(%arg0: i32) -> (i32, i32) {
    %c0_i32 = arith.constant 0 : i32
    %c0_i32_0 = arith.constant 0 : i32
    %c0_i32_1 = arith.constant 0 : i32
    return %c0_i32, %c0_i32_0 : i32, i32
  }
  func.func @transform_3(%arg0: i32) -> (i32, i32) {
    %c0_i32 = arith.constant 0 : i32
    %c0_i32_0 = arith.constant 0 : i32
    %c0_i32_1 = arith.constant 0 : i32
    return %c0_i32, %c0_i32_0 : i32, i32
  }
  func.func @transform_4(%arg0: i32) -> (i32, i32) {
    %c0_i32 = arith.constant 0 : i32
    %c0_i32_0 = arith.constant 0 : i32
    %c0_i32_1 = arith.constant 0 : i32
    return %c0_i32, %c0_i32_0 : i32, i32
  }
  func.func @transform_5(%arg0: i32) -> (i32, i32) {
    %c0_i32 = arith.constant 0 : i32
    %c0_i32_0 = arith.constant 0 : i32
    return %arg0, %c0_i32 : i32, i32
  }
}

</mosaic_0001>

<llo_original>
// kernel: tpu_custom_call.1
$region0: #{tpu_custom_call.1}
  #allocation0 [shape = 'u32[]', space=smem, size = 0x4, offset = 0x4, fixed_abs, tag = 'smem constant byte address 0x4 - core index']
  #allocation1 [shape = 'u32[144,128]{1,0:T(1,128)}', space=vmem, size = 0x12000, scoped, tag = 'internal scratch']
  %s0 = inlined_call_operand.hbm [shape: f32[16,128], index: 0, kind: input, shape index: {}]
  %s1 = inlined_call_operand.hbm [shape: bf16[128,128], index: 1, kind: input, shape index: {}]
  %s2 = inlined_call_operand.vmem [shape: f32[1,128], index: 2, kind: input, shape index: {}]
  %s3 = inlined_call_operand.hbm [shape: bf16[128,128], index: 3, kind: input, shape index: {}]
  %s4 = inlined_call_operand.vmem [shape: f32[1,128], index: 4, kind: input, shape index: {}]
  %s5 = inlined_call_operand.hbm [shape: f32[16,128], index: 5, kind: output, shape index: {}]
  %s6 = sld [smem:[#allocation0]]
  $region42: #{tpu_custom_call.1} parent=0
    _
  %s8 = ssub.s32 1, %s6
  %s9 = scalar_select 0, %s8, %s6
  $region1: #{tpu_custom_call.1} parent=0
    #allocation2 [shape = 'u8[8192]{0}', space=vmem, size = 0x2000, scoped, tag = 'input window, operand 0, single buffered']
    #allocation3 [shape = 's32[1]{0}', space=sflag, size = 0x4, scoped, tag = 'scoped memory for tpu_custom_call.1']
    #allocation4 [shape = 's32[1]{0}', space=sflag, size = 0x4, scoped, tag = 'scoped memory for tpu_custom_call.1']
    #allocation5 [shape = 'u8[32768]{0}', space=vmem, size = 0x8000, scoped, tag = 'input window, operand 1, single buffered']
    #allocation6 [shape = 's32[1]{0}', space=sflag, size = 0x4, scoped, tag = 'scoped memory for tpu_custom_call.1']
    #allocation7 [shape = 'u8[32768]{0}', space=vmem, size = 0x8000, scoped, tag = 'input window, operand 3, single buffered']
    #allocation8 [shape = 'u8[8192]{0}', space=vmem, size = 0x2000, scoped, tag = 'output window, operand 0, single buffered']
    %10 = vsyncpa [#allocation3], 0
    %11 = vsyncpa [#allocation6], 0
    %12 = vsyncpa [#allocation4], 0
    // Predicated region
    $region2: #{tpu_custom_call.1} parent=1 // pred_check
      _
    $region3: #{tpu_custom_call.1} parent=1 // pred_check_branch
      %14 = sbr.rel (0) target = $region5
    $region4: #{tpu_custom_call.1} parent=1 // pred_region
      %s16 = ssub.s32 256, 256
      %17 = vsyncadd [#allocation3], %s16
      %s18 = sshll.u32 [#allocation2], 4
      %s19 = int_to_ptr.vmem [resolvable:$true] %s18
      %24 = dma.hbm_to_vmem [thread:$0]  %s0, 256, %s19, [#allocation3], 128, 128, 8
    $region5: #{tpu_custom_call.1} parent=1 // pred_fallthru
      _
    // Predicated region
    $region6: #{tpu_custom_call.1} parent=1 // pred_check
      _
    $region7: #{tpu_custom_call.1} parent=1 // pred_check_branch
      %26 = sbr.rel (0) target = $region9
    $region8: #{tpu_custom_call.1} parent=1 // pred_region
      %s28 = ssub.s32 1024, 1024
      %29 = vsyncadd [#allocation6], %s28
      %s30 = sshll.u32 [#allocation5], 4
      %s31 = int_to_ptr.vmem [resolvable:$true] %s30
      %36 = dma.hbm_to_vmem [thread:$0]  %s1, 1024, %s31, [#allocation6], 64, 64, 4
    $region9: #{tpu_custom_call.1} parent=1 // pred_fallthru
      _
    // Predicated region
    $region10: #{tpu_custom_call.1} parent=1 // pred_check
      _
    $region11: #{tpu_custom_call.1} parent=1 // pred_check_branch
      %38 = sbr.rel (0) target = $region13
    $region12: #{tpu_custom_call.1} parent=1 // pred_region
      _
    $region13: #{tpu_custom_call.1} parent=1 // pred_fallthru
      _
    // Predicated region
    $region14: #{tpu_custom_call.1} parent=1 // pred_check
      _
    $region15: #{tpu_custom_call.1} parent=1 // pred_check_branch
      %40 = sbr.rel (0) target = $region17
    $region16: #{tpu_custom_call.1} parent=1 // pred_region
      %s42 = ssub.s32 1024, 1024
      %43 = vsyncadd [#allocation6], %s42
      %s44 = sshll.u32 [#allocation7], 4
      %s45 = int_to_ptr.vmem [resolvable:$true] %s44
      %50 = dma.hbm_to_vmem [thread:$0]  %s3, 1024, %s45, [#allocation6], 64, 64, 4
    $region17: #{tpu_custom_call.1} parent=1 // pred_fallthru
      _
    // Predicated region
    $region18: #{tpu_custom_call.1} parent=1 // pred_check
      _
    $region19: #{tpu_custom_call.1} parent=1 // pred_check_branch
      %52 = sbr.rel (0) target = $region21
    $region20: #{tpu_custom_call.1} parent=1 // pred_region
      _
    $region21: #{tpu_custom_call.1} parent=1 // pred_fallthru
      _
    // Predicated region
    $region22: #{tpu_custom_call.1} parent=1 // pred_check
      _
    $region23: #{tpu_custom_call.1} parent=1 // pred_check_branch
      %54 = sbr.rel (0) target = $region25
    $region24: #{tpu_custom_call.1} parent=1 // pred_region
      %55 = dma.done [#allocation3], 256
    $region25: #{tpu_custom_call.1} parent=1 // pred_fallthru
      _
    // Predicated region
    $region26: #{tpu_custom_call.1} parent=1 // pred_check
      _
    $region27: #{tpu_custom_call.1} parent=1 // pred_check_branch
      %57 = sbr.rel (0) target = $region29
    $region28: #{tpu_custom_call.1} parent=1 // pred_region
      %58 = dma.done [#allocation6], 1024
    $region29: #{tpu_custom_call.1} parent=1 // pred_fallthru
      _
    // Predicated region
    $region30: #{tpu_custom_call.1} parent=1 // pred_check
      _
    $region31: #{tpu_custom_call.1} parent=1 // pred_check_branch
      %60 = sbr.rel (0) target = $region33
    $region32: #{tpu_custom_call.1} parent=1 // pred_region
      %61 = dma.done [#allocation6], 1024
    $region33: #{tpu_custom_call.1} parent=1 // pred_fallthru
      _
    %v63 = vld [vmem:[#allocation2] sm:$0xff]
    %v64 = vld [vmem:[#allocation2 + $0x8] sm:$0xff]
    %v65 = vpack.c.bf16 %v64, %v63
    %v66 = vld [vmem:[#allocation5] sm:$0xf]
    %v67 = vld [vmem:[#allocation5 + $0x4] sm:$0xf]
    %v68 = vld [vmem:[#allocation5 + $0x8] sm:$0xf]
    %v69 = vld [vmem:[#allocation5 + $0xc] sm:$0xf]
    %v70 = vld [vmem:[#allocation5 + $0x10] sm:$0xf]
    %v71 = vld [vmem:[#allocation5 + $0x14] sm:$0xf]
    %v72 = vld [vmem:[#allocation5 + $0x18] sm:$0xf]
    %v73 = vld [vmem:[#allocation5 + $0x1c] sm:$0xf]
    %v74 = vld [vmem:[#allocation5 + $0x20] sm:$0xf]
    %v75 = vld [vmem:[#allocation5 + $0x24] sm:$0xf]
    %v76 = vld [vmem:[#allocation5 + $0x28] sm:$0xf]
    %v77 = vld [vmem:[#allocation5 + $0x2c] sm:$0xf]
    %v78 = vld [vmem:[#allocation5 + $0x30] sm:$0xf]
    %v79 = vld [vmem:[#allocation5 + $0x34] sm:$0xf]
    %v80 = vld [vmem:[#allocation5 + $0x38] sm:$0xf]
    %v81 = vld [vmem:[#allocation5 + $0x3c] sm:$0xf]
    %v82 = vld [vmem:[%s2] sm:$0x1]
    %v84 = vlaneseq
    %v85 = vshrl.u32 %v84, 7
    %v86 = vsub.s32 0, %v85
    %v87 = vrot.slane %v82, %v86
    %v105 = vunpack.c.l.b16 %v66
    %v106 = vunpack.c.l.b16 %v67
    %v107 = vunpack.c.l.b16 %v68
    %v108 = vunpack.c.l.b16 %v69
    %v109 = vunpack.c.l.b16 %v70
    %v110 = vunpack.c.l.b16 %v71
    %v111 = vunpack.c.l.b16 %v72
    %v112 = vunpack.c.l.b16 %v73
    %v113 = vunpack.c.l.b16 %v74
    %v114 = vunpack.c.l.b16 %v75
    %v115 = vunpack.c.l.b16 %v76
    %v116 = vunpack.c.l.b16 %v77
    %v117 = vunpack.c.l.b16 %v78
    %v118 = vunpack.c.l.b16 %v79
    %v119 = vunpack.c.l.b16 %v80
    %v120 = vunpack.c.l.b16 %v81
    %v121 = vpack.c.b16 %v106, %v105
    %v122 = vpack.c.b16 %v108, %v107
    %v123 = vpack.c.b16 %v110, %v109
    %v124 = vpack.c.b16 %v112, %v111
    %v125 = vpack.c.b16 %v114, %v113
    %v126 = vpack.c.b16 %v116, %v115
    %v127 = vpack.c.b16 %v118, %v117
    %v128 = vpack.c.b16 %v120, %v119
    %137 = vmatprep.subr.bf16.mxu0 0
    %138 = vmatpush1.bf16.msra.mxu0 %v128
    %139 = vmatprep.subr.bf16.mxu0 0
    %140 = vmatpush1.bf16.msra.mxu0 %v127
    %141 = vmatprep.subr.bf16.mxu0 0
    %142 = vmatpush1.bf16.msra.mxu0 %v126
    %143 = vmatprep.subr.bf16.mxu0 0
    %144 = vmatpush1.bf16.msra.mxu0 %v125
    %145 = vmatprep.subr.bf16.mxu0 0
    %146 = vmatpush1.bf16.msra.mxu0 %v124
    %147 = vmatprep.subr.bf16.mxu0 0
    %148 = vmatpush1.bf16.msra.mxu0 %v123
    %149 = vmatprep.subr.bf16.mxu0 0
    %150 = vmatpush1.bf16.msra.mxu0 %v122
    %151 = vmatprep.subr.bf16.mxu0 0
    %152 = vmatpush1.bf16.msra.mxu0 %v121
    %153 = vmatprep.subr.bf16.mxu0 0
    %154 = vmatpush2.bf16.msra.mxu0 0
    %155 = vmatprep.subr.bf16.mxu0 0
    %156 = vmatpush2.bf16.msra.mxu0 0
    %157 = vmatprep.subr.bf16.mxu0 0
    %158 = vmatpush2.bf16.msra.mxu0 0
    %159 = vmatprep.subr.bf16.mxu0 0
    %160 = vmatpush2.bf16.msra.mxu0 0
    %161 = vmatprep.subr.bf16.mxu0 0
    %162 = vmatpush2.bf16.msra.mxu0 0
    %163 = vmatprep.subr.bf16.mxu0 0
    %164 = vmatpush2.bf16.msra.mxu0 0
    %165 = vmatprep.subr.bf16.mxu0 0
    %166 = vmatpush2.bf16.msra.mxu0 0
    %167 = vmatprep.subr.bf16.mxu0 0
    %168 = vmatpush2.bf16.msra.mxu0 0
    %169 = vmatprep.mubr.bf16.mxu0 0
    %170 = vmatmul.mubr.bf16.gmra.mxu0 %v65
    %v171 = vpop.f32.mrf.mxu0
    %v172 = vadd.f32 %v87, %v171
    %v173 = vpop.f32.mrf.mxu0
    %v174 = vpop.f32.mrf.mxu0
    %v175 = vadd.f32 %v87, %v174
    %v176 = vpop.f32.mrf.mxu0
    %177 = vdwg.mxu0
    %v178 = vmul.f32 %v172, 0.5
    %v179 = vmul.f32 %v175, 0.5
    %v180 = vmul.f32 %v172, 0.70710677
    %v181 = vmul.f32 %v175, 0.70710677
    %v182 = verf.f32.pop %v180
    %v183 = verf.f32.pop %v181
    %v184 = vadd.f32 %v182, 1.0
    %v185 = vadd.f32 %v183, 1.0
    %v186 = vmul.f32 %v178, %v184
    %v187 = vmul.f32 %v179, %v185
    %v188 = vpack.c.bf16 %v187, %v186
    %v189 = vld [vmem:[#allocation7] sm:$0xf]
    %v190 = vld [vmem:[#allocation7 + $0x4] sm:$0xf]
    %v191 = vld [vmem:[#allocation7 + $0x8] sm:$0xf]
    %v192 = vld [vmem:[#allocation7 + $0xc] sm:$0xf]
    %v193 = vld [vmem:[#allocation7 + $0x10] sm:$0xf]
    %v194 = vld [vmem:[#allocation7 + $0x14] sm:$0xf]
    %v195 = vld [vmem:[#allocation7 + $0x18] sm:$0xf]
    %v196 = vld [vmem:[#allocation7 + $0x1c] sm:$0xf]
    %v197 = vld [vmem:[#allocation7 + $0x20] sm:$0xf]
    %v198 = vld [vmem:[#allocation7 + $0x24] sm:$0xf]
    %v199 = vld [vmem:[#allocation7 + $0x28] sm:$0xf]
    %v200 = vld [vmem:[#allocation7 + $0x2c] sm:$0xf]
    %v201 = vld [vmem:[#allocation7 + $0x30] sm:$0xf]
    %v202 = vld [vmem:[#allocation7 + $0x34] sm:$0xf]
    %v203 = vld [vmem:[#allocation7 + $0x38] sm:$0xf]
    %v204 = vld [vmem:[#allocation7 + $0x3c] sm:$0xf]
    %v205 = vld [vmem:[%s4] sm:$0x1]
    %v207 = vlaneseq
    %v208 = vshrl.u32 %v207, 7
    %v209 = vsub.s32 0, %v208
    %v210 = vrot.slane %v205, %v209
    %v228 = vunpack.c.l.b16 %v189
    %v229 = vunpack.c.l.b16 %v190
    %v230 = vunpack.c.l.b16 %v191
    %v231 = vunpack.c.l.b16 %v192
    %v232 = vunpack.c.l.b16 %v193
    %v233 = vunpack.c.l.b16 %v194
    %v234 = vunpack.c.l.b16 %v195
    %v235 = vunpack.c.l.b16 %v196
    %v236 = vunpack.c.l.b16 %v197
    %v237 = vunpack.c.l.b16 %v198
    %v238 = vunpack.c.l.b16 %v199
    %v239 = vunpack.c.l.b16 %v200
    %v240 = vunpack.c.l.b16 %v201
    %v241 = vunpack.c.l.b16 %v202
    %v242 = vunpack.c.l.b16 %v203
    %v243 = vunpack.c.l.b16 %v204
    %v244 = vpack.c.b16 %v229, %v228
    %v245 = vpack.c.b16 %v231, %v230
    %v246 = vpack.c.b16 %v233, %v232
    %v247 = vpack.c.b16 %v235, %v234
    %v248 = vpack.c.b16 %v237, %v236
    %v249 = vpack.c.b16 %v239, %v238
    %v250 = vpack.c.b16 %v241, %v240
    %v251 = vpack.c.b16 %v243, %v242
    %260 = vmatprep.subr.bf16.mxu0 0
    %261 = vmatpush1.bf16.msra.mxu0 %v251
    %262 = vmatprep.subr.bf16.mxu0 0
    %263 = vmatpush1.bf16.msra.mxu0 %v250
    %264 = vmatprep.subr.bf16.mxu0 0
    %265 = vmatpush1.bf16.msra.mxu0 %v249
    %266 = vmatprep.subr.bf16.mxu0 0
    %267 = vmatpush1.bf16.msra.mxu0 %v248
    %268 = vmatprep.subr.bf16.mxu0 0
    %269 = vmatpush1.bf16.msra.mxu0 %v247
    %270 = vmatprep.subr.bf16.mxu0 0
    %271 = vmatpush1.bf16.msra.mxu0 %v246
    %272 = vmatprep.subr.bf16.mxu0 0
    %273 = vmatpush1.bf16.msra.mxu0 %v245
    %274 = vmatprep.subr.bf16.mxu0 0
    %275 = vmatpush1.bf16.msra.mxu0 %v244
    %276 = vmatprep.subr.bf16.mxu0 0
    %277 = vmatpush2.bf16.msra.mxu0 0
    %278 = vmatprep.subr.bf16.mxu0 0
    %279 = vmatpush2.bf16.msra.mxu0 0
    %280 = vmatprep.subr.bf16.mxu0 0
    %281 = vmatpush2.bf16.msra.mxu0 0
    %282 = vmatprep.subr.bf16.mxu0 0
    %283 = vmatpush2.bf16.msra.mxu0 0
    %284 = vmatprep.subr.bf16.mxu0 0
    %285 = vmatpush2.bf16.msra.mxu0 0
    %286 = vmatprep.subr.bf16.mxu0 0
    %287 = vmatpush2.bf16.msra.mxu0 0
    %288 = vmatprep.subr.bf16.mxu0 0
    %289 = vmatpush2.bf16.msra.mxu0 0
    %290 = vmatprep.subr.bf16.mxu0 0
    %291 = vmatpush2.bf16.msra.mxu0 0
    %292 = vmatprep.mubr.bf16.mxu0 0
    %293 = vmatmul.mubr.bf16.gmra.mxu0 %v188
    %v294 = vpop.f32.mrf.mxu0
    %v295 = vadd.f32 %v210, %v294
    %v296 = vpop.f32.mrf.mxu0
    %v297 = vpop.f32.mrf.mxu0
    %v298 = vadd.f32 %v210, %v297
    %v299 = vpop.f32.mrf.mxu0
    %300 = vdwg.mxu0
    %301 = vst [vmem:[#allocation8] sm:$0xff] %v295
    %302 = vst [vmem:[#allocation8 + $0x8] sm:$0xff] %v298
    // Predicated region
    $region34: #{tpu_custom_call.1} parent=1 // pred_check
      _
    $region35: #{tpu_custom_call.1} parent=1 // pred_check_branch
      %304 = sbr.rel (0) target = $region37
    $region36: #{tpu_custom_call.1} parent=1 // pred_region
      %s306 = ssub.s32 256, 256
      %307 = vsyncadd [#allocation4], %s306
      %s308 = sshll.u32 [#allocation8], 4
      %s309 = int_to_ptr.vmem [resolvable:$true] %s308
      %314 = dma.vmem_to_hbm [thread:$0]  %s309, 256, %s5, [#allocation4], 128, 128, 8
    $region37: #{tpu_custom_call.1} parent=1 // pred_fallthru
      _
    // Predicated region
    $region38: #{tpu_custom_call.1} parent=1 // pred_check
      _
    $region39: #{tpu_custom_call.1} parent=1 // pred_check_branch
      %316 = sbr.rel (0) target = $region41
    $region40: #{tpu_custom_call.1} parent=1 // pred_region
      %317 = dma.done [#allocation4], 256
    $region41: #{tpu_custom_call.1} parent=1 // pred_fallthru
      _
    %318 = vsyncpa [#allocation3], 1
    %319 = vsyncpa [#allocation6], 1
    %320 = vsyncpa [#allocation4], 1

</llo_original>
